<compile_context>
chip_gen: v6e
topology: v6e:2x2x1
jax: 0.10.0
libtpu: 0.0.40
codegen_flags: <defaults>
</compile_context>

<pallas_src>
import functools
import math

import jax
import jax.numpy as jnp
from jax.experimental import pallas as pl
from jax.experimental.pallas import tpu as pltpu


def _critic_kernel(state_ref, action_ref,
                   w1_ref, b1_ref,
                   w2h_ref, w2a_ref, b2_ref,
                   w3_ref, b3_ref,
                   w4_ref, b4_ref,
                   w5_ref, b5_ref,
                   out_ref):
    """One batch tile of the Critic MLP: 5 MXU dots + 1 VPU/XLU reduce + 4 ReLUs.

    Weight matmul operands arrive pre-cast to bf16 (MXU native on all
    generations); accumulation and elementwise math stay in f32.
    """
    bf16 = jnp.bfloat16
    f32 = jnp.float32

    x = state_ref[...]                        # [TB, S] f32
    a = action_ref[...]                       # [TB, A] f32

    # fc1 + relu
    h1 = jnp.dot(x.astype(bf16), w1_ref[...], preferred_element_type=f32)
    h1 = jnp.maximum(h1 + b1_ref[...], 0.0)

    # fc2 on concat([h1, action], 1), expressed as a block matmul:
    #   [h1 | a] @ [[w2h], [w2a]] == h1 @ w2h + a @ w2a
    # Two MXU pushes, f32 accumulation; no concat / scratch needed.
    h2 = jnp.dot(h1.astype(bf16), w2h_ref[...], preferred_element_type=f32)
    h2 = h2 + jnp.dot(a.astype(bf16), w2a_ref[...], preferred_element_type=f32)
    h2 = jnp.maximum(h2 + b2_ref[...], 0.0)

    # fc3 + relu
    h3 = jnp.dot(h2.astype(bf16), w3_ref[...], preferred_element_type=f32)
    h3 = jnp.maximum(h3 + b3_ref[...], 0.0)

    # fc4 + relu
    h4 = jnp.dot(h3.astype(bf16), w4_ref[...], preferred_element_type=f32)
    h4 = jnp.maximum(h4 + b4_ref[...], 0.0)

    # fc5 (single output column): VPU multiply + XLU row reduce instead of a
    # wasted N=1 MXU pass.  w5_ref is a [1, hidden4] f32 row.
    out_ref[...] = jnp.sum(h4 * w5_ref[...], axis=-1, keepdims=True) + b5_ref[...]


def _round_up(x, m):
    return ((x + m - 1) // m) * m


@functools.partial(jax.jit, static_argnames=("tile_b",))
def critic_forward(state, action, params, tile_b=1024):
    """Batched-grid pallas_call; weights stay VMEM-resident across the grid."""
    (w1, b1, w2, b2, w3, b3, w4, b4, w5, b5) = params
    batch = state.shape[0]
    hidden1 = w1.shape[1]

    # Large batch tile: hidden dims are tiny, so per-step overhead dominates
    # with small tiles; tile_b x (<=128)-lane f32 activations are well under
    # VMEM limits on v5e/v6e (128 MiB) and v7x (64 MiB).
    tb = min(tile_b, _round_up(batch, 8))
    batch_p = _round_up(batch, tb)
    if batch_p != batch:
        pad = batch_p - batch
        state = jnp.pad(state, ((0, pad), (0, 0)))
        action = jnp.pad(action, ((0, pad), (0, 0)))

    # bf16 matmul operands (halves weight HBM bytes too); f32 biases / fc5 row.
    bf16 = jnp.bfloat16
    w1b, w3b, w4b = (w.astype(bf16) for w in (w1, w3, w4))
    # Split fc2's weight into the h1 rows and the action rows (static slices).
    w2hb = w2[:hidden1].astype(bf16)          # [hidden1, hidden2]
    w2ab = w2[hidden1:].astype(bf16)          # [nb_actions, hidden2]

    def batch_map(i):
        return (i, 0)

    def resident_map(i):
        return (0, 0)            # weights/biases: same block every grid step

    def batched(arr):
        return pl.BlockSpec((tb, arr.shape[1]), batch_map)

    def resident(arr):
        return pl.BlockSpec(arr.shape, resident_map)

    out = pl.pallas_call(
        _critic_kernel,
        out_shape=jax.ShapeDtypeStruct((batch_p, 1), jnp.float32),
        grid=(batch_p // tb,),
        in_specs=[
            batched(state), batched(action),
            resident(w1b), resident(b1),
            resident(w2hb), resident(w2ab), resident(b2),
            resident(w3b), resident(b3),
            resident(w4b), resident(b4),
            resident(w5), resident(b5),
        ],
        out_specs=pl.BlockSpec((tb, 1), batch_map),
        compiler_params=pltpu.CompilerParams(
            dimension_semantics=("parallel",)),   # v7x: shard batch over 2 TCs
    )(state, action, w1b, b1, w2hb, w2ab, b2, w3b, b3, w4b, b4, w5, b5)

    return out[:batch]


def _uniform(key, shape, bound):
    return jax.random.uniform(key, shape, jnp.float32, minval=-bound, maxval=bound)


def init_critic_params(key, nb_states, nb_actions,
                       hidden1=32, hidden2=64, hidden3=32, hidden4=32,
                       init_w=0.003):
    """Deterministic init matching the PyTorch module's scheme.

    fanin_init(size) on a PyTorch weight of shape (out, in) uses size[0] =
    out_features as the fan-in -> bound 1/sqrt(out_features).  Biases keep
    nn.Linear's default U(-1/sqrt(in), 1/sqrt(in)).  fc5 weight ~ U(-init_w,
    init_w).  Weights are stored transposed as [in, out]; fc5's weight is a
    [1, hidden4] row for the in-kernel VPU reduce.
    """
    ks = jax.random.split(key, 10)

    def linear(kw, kb, in_f, out_f, w_bound):
        w = _uniform(kw, (in_f, out_f), w_bound)
        b = _uniform(kb, (1, out_f), 1.0 / math.sqrt(in_f))
        return w, b

    w1, b1 = linear(ks[0], ks[1], nb_states, hidden1, 1.0 / math.sqrt(hidden1))
    w2, b2 = linear(ks[2], ks[3], hidden1 + nb_actions, hidden2,
                    1.0 / math.sqrt(hidden2))
    w3, b3 = linear(ks[4], ks[5], hidden2, hidden3, 1.0 / math.sqrt(hidden3))
    w4, b4 = linear(ks[6], ks[7], hidden3, hidden4, 1.0 / math.sqrt(hidden4))
    # fc5 is declared Linear(hidden3, 1) but fed fc4's output; valid only when
    # hidden3 == hidden4 (otherwise the reference module errors).
    w5_col, b5 = linear(ks[8], ks[9], hidden4, 1, init_w)
    w5 = w5_col.T                              # [1, hidden4]

    return (w1, b1, w2, b2, w3, b3, w4, b4, w5, b5)


def critic_reference(state, action, params):
    """Plain-JAX reference with the same dtype path (bf16 operands, f32 acc)."""
    (w1, b1, w2, b2, w3, b3, w4, b4, w5, b5) = params
    bf16, f32 = jnp.bfloat16, jnp.float32

    def dot(x, w):
        return jnp.dot(x.astype(bf16), w.astype(bf16),
                       preferred_element_type=f32)

    h1 = jnp.maximum(dot(state, w1) + b1, 0.0)
    cat = jnp.concatenate([h1, action], axis=1)
    h2 = jnp.maximum(dot(cat, w2) + b2, 0.0)
    h3 = jnp.maximum(dot(h2, w3) + b3, 0.0)
    h4 = jnp.maximum(dot(h3, w4) + b4, 0.0)
    return jnp.sum(h4 * w5, axis=-1, keepdims=True) + b5


if __name__ == "__main__":
    # Small shapes consistent with Critic.forward(state, action).
    batch, nb_states, nb_actions = 8, 16, 8
    hidden1, hidden2, hidden3, hidden4 = 32, 64, 32, 32

    key = jax.random.PRNGKey(0)
    k_state, k_action, k_params = jax.random.split(key, 3)
    state = jax.random.normal(k_state, (batch, nb_states), jnp.float32)
    action = jax.random.normal(k_action, (batch, nb_actions), jnp.float32)

    params = init_critic_params(k_params, nb_states, nb_actions,
                                hidden1, hidden2, hidden3, hidden4)

    out = critic_forward(state, action, params)
    jax.block_until_ready(out)

    ref = critic_reference(state, action, params)
    assert out.shape == (batch, 1), out.shape
    # bf16 matmul operands -> looser tolerance than pure-f32.
    assert jnp.allclose(out, ref, atol=2e-2, rtol=2e-2), (out, ref)

    print("KERNEL_OK")
</pallas_src>

<mosaic_0001>
module attributes {stable_mosaic.version = 11 : i64} {
  func.func @_critic_kernel(%arg0: i32, %arg1: memref<8x16xf32, #tpu.memory_space<vmem>>, %arg2: memref<8x8xf32, #tpu.memory_space<vmem>>, %arg3: memref<16x32xbf16, #tpu.memory_space<vmem>>, %arg4: memref<1x32xf32, #tpu.memory_space<vmem>>, %arg5: memref<32x64xbf16, #tpu.memory_space<vmem>>, %arg6: memref<8x64xbf16, #tpu.memory_space<vmem>>, %arg7: memref<1x64xf32, #tpu.memory_space<vmem>>, %arg8: memref<64x32xbf16, #tpu.memory_space<vmem>>, %arg9: memref<1x32xf32, #tpu.memory_space<vmem>>, %arg10: memref<32x32xbf16, #tpu.memory_space<vmem>>, %arg11: memref<1x32xf32, #tpu.memory_space<vmem>>, %arg12: memref<1x32xf32, #tpu.memory_space<vmem>>, %arg13: memref<1x1xf32, #tpu.memory_space<vmem>>, %arg14: memref<8x1xf32, #tpu.memory_space<vmem>>) attributes {dimension_semantics = [#tpu.dimension_semantics<parallel>], iteration_bounds = array<i64: 1>, scalar_prefetch = 0 : i64, scratch_operands = 0 : i64, tpu.core_type = #tpu.core_type<tc>, window_params = [{transform_indices = @transform_0, window_bounds = array<i64: 8, 16>}, {transform_indices = @transform_1, window_bounds = array<i64: 8, 8>}, {pipeline_mode = #tpu.pipeline_mode<synchronous>, transform_indices = @transform_2, window_bounds = array<i64: 16, 32>}, {pipeline_mode = #tpu.pipeline_mode<synchronous>, transform_indices = @transform_3, window_bounds = array<i64: 1, 32>}, {pipeline_mode = #tpu.pipeline_mode<synchronous>, transform_indices = @transform_4, window_bounds = array<i64: 32, 64>}, {pipeline_mode = #tpu.pipeline_mode<synchronous>, transform_indices = @transform_5, window_bounds = array<i64: 8, 64>}, {pipeline_mode = #tpu.pipeline_mode<synchronous>, transform_indices = @transform_6, window_bounds = array<i64: 1, 64>}, {pipeline_mode = #tpu.pipeline_mode<synchronous>, transform_indices = @transform_7, window_bounds = array<i64: 64, 32>}, {pipeline_mode = #tpu.pipeline_mode<synchronous>, transform_indices = @transform_8, window_bounds = array<i64: 1, 32>}, {pipeline_mode = #tpu.pipeline_mode<synchronous>, transform_indices = @transform_9, window_bounds = array<i64: 32, 32>}, {pipeline_mode = #tpu.pipeline_mode<synchronous>, transform_indices = @transform_10, window_bounds = array<i64: 1, 32>}, {pipeline_mode = #tpu.pipeline_mode<synchronous>, transform_indices = @transform_11, window_bounds = array<i64: 1, 32>}, {pipeline_mode = #tpu.pipeline_mode<synchronous>, transform_indices = @transform_12, window_bounds = array<i64: 1, 1>}, {transform_indices = @transform_13, window_bounds = array<i64: 8, 1>}]} {
    %c0 = arith.constant 0 : index
    %c0_0 = arith.constant 0 : index
    %0 = vector.load %arg1[%c0, %c0_0] : memref<8x16xf32, #tpu.memory_space<vmem>>, vector<8x16xf32>
    %c0_1 = arith.constant 0 : index
    %c0_2 = arith.constant 0 : index
    %1 = vector.load %arg2[%c0_1, %c0_2] : memref<8x8xf32, #tpu.memory_space<vmem>>, vector<8x8xf32>
    %2 = arith.truncf %0 : vector<8x16xf32> to vector<8x16xbf16>
    %c0_3 = arith.constant 0 : index
    %c0_4 = arith.constant 0 : index
    %3 = vector.load %arg3[%c0_3, %c0_4] : memref<16x32xbf16, #tpu.memory_space<vmem>>, vector<16x32xbf16>
    %cst = arith.constant dense<0.000000e+00> : vector<8x32xf32>
    %4 = tpu.matmul %2, %3, %cst {dimension_numbers = #tpu.dot_dimension_numbers<[1], [0], [0], [1], [0, 0, 1, 1], [], []>} : vector<8x16xbf16>, vector<16x32xbf16>, vector<8x32xf32> -> vector<8x32xf32>
    %c0_5 = arith.constant 0 : index
    %c0_6 = arith.constant 0 : index
    %5 = vector.load %arg4[%c0_5, %c0_6] : memref<1x32xf32, #tpu.memory_space<vmem>>, vector<1x32xf32>
    %6 = vector.broadcast %5 : vector<1x32xf32> to vector<8x32xf32>
    %7 = arith.addf %4, %6 : vector<8x32xf32>
    %cst_7 = arith.constant 0.000000e+00 : f32
    %8 = vector.broadcast %cst_7 : f32 to vector<8x32xf32>
    %9 = arith.maximumf %7, %8 : vector<8x32xf32>
    %10 = arith.truncf %9 : vector<8x32xf32> to vector<8x32xbf16>
    %c0_8 = arith.constant 0 : index
    %c0_9 = arith.constant 0 : index
    %11 = vector.load %arg5[%c0_8, %c0_9] : memref<32x64xbf16, #tpu.memory_space<vmem>>, vector<32x64xbf16>
    %cst_10 = arith.constant dense<0.000000e+00> : vector<8x64xf32>
    %12 = tpu.matmul %10, %11, %cst_10 {dimension_numbers = #tpu.dot_dimension_numbers<[1], [0], [0], [1], [0, 0, 1, 1], [], []>} : vector<8x32xbf16>, vector<32x64xbf16>, vector<8x64xf32> -> vector<8x64xf32>
    %13 = arith.truncf %1 : vector<8x8xf32> to vector<8x8xbf16>
    %c0_11 = arith.constant 0 : index
    %c0_12 = arith.constant 0 : index
    %14 = vector.load %arg6[%c0_11, %c0_12] : memref<8x64xbf16, #tpu.memory_space<vmem>>, vector<8x64xbf16>
    %cst_13 = arith.constant dense<0.000000e+00> : vector<8x64xf32>
    %15 = tpu.matmul %13, %14, %cst_13 {dimension_numbers = #tpu.dot_dimension_numbers<[1], [0], [0], [1], [0, 0, 1, 1], [], []>} : vector<8x8xbf16>, vector<8x64xbf16>, vector<8x64xf32> -> vector<8x64xf32>
    %16 = arith.addf %12, %15 : vector<8x64xf32>
    %c0_14 = arith.constant 0 : index
    %c0_15 = arith.constant 0 : index
    %17 = vector.load %arg7[%c0_14, %c0_15] : memref<1x64xf32, #tpu.memory_space<vmem>>, vector<1x64xf32>
    %18 = vector.broadcast %17 : vector<1x64xf32> to vector<8x64xf32>
    %19 = arith.addf %16, %18 : vector<8x64xf32>
    %cst_16 = arith.constant 0.000000e+00 : f32
    %20 = vector.broadcast %cst_16 : f32 to vector<8x64xf32>
    %21 = arith.maximumf %19, %20 : vector<8x64xf32>
    %22 = arith.truncf %21 : vector<8x64xf32> to vector<8x64xbf16>
    %c0_17 = arith.constant 0 : index
    %c0_18 = arith.constant 0 : index
    %23 = vector.load %arg8[%c0_17, %c0_18] : memref<64x32xbf16, #tpu.memory_space<vmem>>, vector<64x32xbf16>
    %cst_19 = arith.constant dense<0.000000e+00> : vector<8x32xf32>
    %24 = tpu.matmul %22, %23, %cst_19 {dimension_numbers = #tpu.dot_dimension_numbers<[1], [0], [0], [1], [0, 0, 1, 1], [], []>} : vector<8x64xbf16>, vector<64x32xbf16>, vector<8x32xf32> -> vector<8x32xf32>
    %c0_20 = arith.constant 0 : index
    %c0_21 = arith.constant 0 : index
    %25 = vector.load %arg9[%c0_20, %c0_21] : memref<1x32xf32, #tpu.memory_space<vmem>>, vector<1x32xf32>
    %26 = vector.broadcast %25 : vector<1x32xf32> to vector<8x32xf32>
    %27 = arith.addf %24, %26 : vector<8x32xf32>
    %cst_22 = arith.constant 0.000000e+00 : f32
    %28 = vector.broadcast %cst_22 : f32 to vector<8x32xf32>
    %29 = arith.maximumf %27, %28 : vector<8x32xf32>
    %30 = arith.truncf %29 : vector<8x32xf32> to vector<8x32xbf16>
    %c0_23 = arith.constant 0 : index
    %c0_24 = arith.constant 0 : index
    %31 = vector.load %arg10[%c0_23, %c0_24] : memref<32x32xbf16, #tpu.memory_space<vmem>>, vector<32x32xbf16>
    %cst_25 = arith.constant dense<0.000000e+00> : vector<8x32xf32>
    %32 = tpu.matmul %30, %31, %cst_25 {dimension_numbers = #tpu.dot_dimension_numbers<[1], [0], [0], [1], [0, 0, 1, 1], [], []>} : vector<8x32xbf16>, vector<32x32xbf16>, vector<8x32xf32> -> vector<8x32xf32>
    %c0_26 = arith.constant 0 : index
    %c0_27 = arith.constant 0 : index
    %33 = vector.load %arg11[%c0_26, %c0_27] : memref<1x32xf32, #tpu.memory_space<vmem>>, vector<1x32xf32>
    %34 = vector.broadcast %33 : vector<1x32xf32> to vector<8x32xf32>
    %35 = arith.addf %32, %34 : vector<8x32xf32>
    %cst_28 = arith.constant 0.000000e+00 : f32
    %36 = vector.broadcast %cst_28 : f32 to vector<8x32xf32>
    %37 = arith.maximumf %35, %36 : vector<8x32xf32>
    %c0_29 = arith.constant 0 : index
    %c0_30 = arith.constant 0 : index
    %38 = vector.load %arg12[%c0_29, %c0_30] : memref<1x32xf32, #tpu.memory_space<vmem>>, vector<1x32xf32>
    %39 = vector.broadcast %38 : vector<1x32xf32> to vector<8x32xf32>
    %40 = arith.mulf %37, %39 : vector<8x32xf32>
    %cst_31 = arith.constant dense<0.000000e+00> : vector<8xf32>
    %41 = vector.multi_reduction <add>, %40, %cst_31 [1] : vector<8x32xf32> to vector<8xf32>
    %42 = vector.shape_cast %41 : vector<8xf32> to vector<8x1xf32>
    %c0_32 = arith.constant 0 : index
    %c0_33 = arith.constant 0 : index
    %43 = vector.load %arg13[%c0_32, %c0_33] : memref<1x1xf32, #tpu.memory_space<vmem>>, vector<1x1xf32>
    %44 = vector.broadcast %43 : vector<1x1xf32> to vector<8x1xf32>
    %45 = arith.addf %42, %44 : vector<8x1xf32>
    %c0_34 = arith.constant 0 : index
    %c0_35 = arith.constant 0 : index
    %46 = vector.load %arg14[%c0_34, %c0_35] : memref<8x1xf32, #tpu.memory_space<vmem>>, vector<8x1xf32>
    tpu.vector_store %arg14[%c0_34, %c0_35], %45 {strides = array<i32>} : memref<8x1xf32, #tpu.memory_space<vmem>>, vector<8x1xf32>,
    return
  }
  func.func @transform_0(%arg0: i32) -> (i32, i32) {
    %c0_i32 = arith.constant 0 : i32
    %c0_i32_0 = arith.constant 0 : i32
    return %arg0, %c0_i32 : i32, i32
  }
  func.func @transform_1(%arg0: i32) -> (i32, i32) {
    %c0_i32 = arith.constant 0 : i32
    %c0_i32_0 = arith.constant 0 : i32
    return %arg0, %c0_i32 : i32, i32
  }
  func.func @transform_2(%arg0: i32) -> (i32, i32) {
    %c0_i32 = arith.constant 0 : i32
    %c0_i32_0 = arith.constant 0 : i32
    %c0_i32_1 = arith.constant 0 : i32
    return %c0_i32, %c0_i32_0 : i32, i32
  }
  func.func @transform_3(%arg0: i32) -> (i32, i32) {
    %c0_i32 = arith.constant 0 : i32
    %c0_i32_0 = arith.constant 0 : i32
    %c0_i32_1 = arith.constant 0 : i32
    return %c0_i32, %c0_i32_0 : i32, i32
  }
  func.func @transform_4(%arg0: i32) -> (i32, i32) {
    %c0_i32 = arith.constant 0 : i32
    %c0_i32_0 = arith.constant 0 : i32
    %c0_i32_1 = arith.constant 0 : i32
    return %c0_i32, %c0_i32_0 : i32, i32
  }
  func.func @transform_5(%arg0: i32) -> (i32, i32) {
    %c0_i32 = arith.constant 0 : i32
    %c0_i32_0 = arith.constant 0 : i32
    %c0_i32_1 = arith.constant 0 : i32
    return %c0_i32, %c0_i32_0 : i32, i32
  }
  func.func @transform_6(%arg0: i32) -> (i32, i32) {
    %c0_i32 = arith.constant 0 : i32
    %c0_i32_0 = arith.constant 0 : i32
    %c0_i32_1 = arith.constant 0 : i32
    return %c0_i32, %c0_i32_0 : i32, i32
  }
  func.func @transform_7(%arg0: i32) -> (i32, i32) {
    %c0_i32 = arith.constant 0 : i32
    %c0_i32_0 = arith.constant 0 : i32
    %c0_i32_1 = arith.constant 0 : i32
    return %c0_i32, %c0_i32_0 : i32, i32
  }
  func.func @transform_8(%arg0: i32) -> (i32, i32) {
    %c0_i32 = arith.constant 0 : i32
    %c0_i32_0 = arith.constant 0 : i32
    %c0_i32_1 = arith.constant 0 : i32
    return %c0_i32, %c0_i32_0 : i32, i32
  }
  func.func @transform_9(%arg0: i32) -> (i32, i32) {
    %c0_i32 = arith.constant 0 : i32
    %c0_i32_0 = arith.constant 0 : i32
    %c0_i32_1 = arith.constant 0 : i32
    return %c0_i32, %c0_i32_0 : i32, i32
  }
  func.func @transform_10(%arg0: i32) -> (i32, i32) {
    %c0_i32 = arith.constant 0 : i32
    %c0_i32_0 = arith.constant 0 : i32
    %c0_i32_1 = arith.constant 0 : i32
    return %c0_i32, %c0_i32_0 : i32, i32
  }
  func.func @transform_11(%arg0: i32) -> (i32, i32) {
    %c0_i32 = arith.constant 0 : i32
    %c0_i32_0 = arith.constant 0 : i32
    %c0_i32_1 = arith.constant 0 : i32
    return %c0_i32, %c0_i32_0 : i32, i32
  }
  func.func @transform_12(%arg0: i32) -> (i32, i32) {
    %c0_i32 = arith.constant 0 : i32
    %c0_i32_0 = arith.constant 0 : i32
    %c0_i32_1 = arith.constant 0 : i32
    return %c0_i32, %c0_i32_0 : i32, i32
  }
  func.func @transform_13(%arg0: i32) -> (i32, i32) {
    %c0_i32 = arith.constant 0 : i32
    %c0_i32_0 = arith.constant 0 : i32
    return %arg0, %c0_i32 : i32, i32
  }
}

</mosaic_0001>

<llo_original>
// kernel: critic_forward.1
$region0: #{critic_forward.1}
  #allocation0 [shape = 'u32[]', space=smem, size = 0x4, offset = 0x4, fixed_abs, tag = 'smem constant byte address 0x4 - core index']
  #allocation1 [shape = 'u32[144,128]{1,0:T(1,128)}', space=vmem, size = 0x12000, scoped, tag = 'internal scratch']
  #allocation2 [shape = 'f32[1,1]{1,0:T(1,128)S(1)}', space=vmem, size = 0x200, scoped, tag = 'scoped memory for critic_forward.1']
  %s0 = inlined_call_operand.vmem [shape: f32[8,16], index: 0, kind: input, shape index: {}]
  %s1 = inlined_call_operand.vmem [shape: f32[8,8], index: 1, kind: input, shape index: {}]
  %s2 = inlined_call_operand.vmem [shape: bf16[16,32], index: 2, kind: input, shape index: {}]
  %s3 = inlined_call_operand.vmem [shape: f32[1,32], index: 3, kind: input, shape index: {}]
  %s4 = inlined_call_operand.vmem [shape: bf16[32,64], index: 4, kind: input, shape index: {}]
  %s5 = inlined_call_operand.vmem [shape: bf16[8,64], index: 5, kind: input, shape index: {}]
  %s6 = inlined_call_operand.vmem [shape: f32[1,64], index: 6, kind: input, shape index: {}]
  %s7 = inlined_call_operand.vmem [shape: bf16[64,32], index: 7, kind: input, shape index: {}]
  %s8 = inlined_call_operand.vmem [shape: f32[1,32], index: 8, kind: input, shape index: {}]
  %s9 = inlined_call_operand.vmem [shape: bf16[32,32], index: 9, kind: input, shape index: {}]
  %s10 = inlined_call_operand.vmem [shape: f32[1,32], index: 10, kind: input, shape index: {}]
  %s11 = inlined_call_operand.vmem [shape: f32[1,32], index: 11, kind: input, shape index: {}]
  %s12 = inlined_call_operand.<no memory space> [shape: f32[1,1], index: 12, kind: input, shape index: {}]
  %s13 = inlined_call_operand.vmem [shape: f32[8,1], index: 13, kind: output, shape index: {}]
  %s14 = sld [smem:[#allocation0]]
  $region62: #{critic_forward.1} parent=0
    _
  %s16 = ssub.s32 1, %s14
  %s17 = scalar_select 0, %s16, %s14
  %v18 = vstv %s12
  %19 = vst [vmem:[#allocation2] sm:$0x1] %v18
  // Predicated region
  $region2: #{critic_forward.1} parent=0 // pred_check
    _
  $region3: #{critic_forward.1} parent=0 // pred_check_branch
    %21 = sbr.rel (0) target = $region5
  $region4: #{critic_forward.1} parent=0 // pred_region
    _
  $region5: #{critic_forward.1} parent=0 // pred_fallthru
    _
  // Predicated region
  $region6: #{critic_forward.1} parent=0 // pred_check
    _
  $region7: #{critic_forward.1} parent=0 // pred_check_branch
    %23 = sbr.rel (0) target = $region9
  $region8: #{critic_forward.1} parent=0 // pred_region
    _
  $region9: #{critic_forward.1} parent=0 // pred_fallthru
    _
  // Predicated region
  $region10: #{critic_forward.1} parent=0 // pred_check
    _
  $region11: #{critic_forward.1} parent=0 // pred_check_branch
    %25 = sbr.rel (0) target = $region13
  $region12: #{critic_forward.1} parent=0 // pred_region
    _
  $region13: #{critic_forward.1} parent=0 // pred_fallthru
    _
  // Predicated region
  $region14: #{critic_forward.1} parent=0 // pred_check
    _
  $region15: #{critic_forward.1} parent=0 // pred_check_branch
    %27 = sbr.rel (0) target = $region17
  $region16: #{critic_forward.1} parent=0 // pred_region
    _
  $region17: #{critic_forward.1} parent=0 // pred_fallthru
    _
  // Predicated region
  $region18: #{critic_forward.1} parent=0 // pred_check
    _
  $region19: #{critic_forward.1} parent=0 // pred_check_branch
    %29 = sbr.rel (0) target = $region21
  $region20: #{critic_forward.1} parent=0 // pred_region
    _
  $region21: #{critic_forward.1} parent=0 // pred_fallthru
    _
  // Predicated region
  $region22: #{critic_forward.1} parent=0 // pred_check
    _
  $region23: #{critic_forward.1} parent=0 // pred_check_branch
    %31 = sbr.rel (0) target = $region25
  $region24: #{critic_forward.1} parent=0 // pred_region
    _
  $region25: #{critic_forward.1} parent=0 // pred_fallthru
    _
  // Predicated region
  $region26: #{critic_forward.1} parent=0 // pred_check
    _
  $region27: #{critic_forward.1} parent=0 // pred_check_branch
    %33 = sbr.rel (0) target = $region29
  $region28: #{critic_forward.1} parent=0 // pred_region
    _
  $region29: #{critic_forward.1} parent=0 // pred_fallthru
    _
  // Predicated region
  $region30: #{critic_forward.1} parent=0 // pred_check
    _
  $region31: #{critic_forward.1} parent=0 // pred_check_branch
    %35 = sbr.rel (0) target = $region33
  $region32: #{critic_forward.1} parent=0 // pred_region
    _
  $region33: #{critic_forward.1} parent=0 // pred_fallthru
    _
  // Predicated region
  $region34: #{critic_forward.1} parent=0 // pred_check
    _
  $region35: #{critic_forward.1} parent=0 // pred_check_branch
    %37 = sbr.rel (0) target = $region37
  $region36: #{critic_forward.1} parent=0 // pred_region
    _
  $region37: #{critic_forward.1} parent=0 // pred_fallthru
    _
  // Predicated region
  $region38: #{critic_forward.1} parent=0 // pred_check
    _
  $region39: #{critic_forward.1} parent=0 // pred_check_branch
    %39 = sbr.rel (0) target = $region41
  $region40: #{critic_forward.1} parent=0 // pred_region
    _
  $region41: #{critic_forward.1} parent=0 // pred_fallthru
    _
  // Predicated region
  $region42: #{critic_forward.1} parent=0 // pred_check
    _
  $region43: #{critic_forward.1} parent=0 // pred_check_branch
    %41 = sbr.rel (0) target = $region45
  $region44: #{critic_forward.1} parent=0 // pred_region
    _
  $region45: #{critic_forward.1} parent=0 // pred_fallthru
    _
  // Predicated region
  $region46: #{critic_forward.1} parent=0 // pred_check
    _
  $region47: #{critic_forward.1} parent=0 // pred_check_branch
    %43 = sbr.rel (0) target = $region49
  $region48: #{critic_forward.1} parent=0 // pred_region
    _
  $region49: #{critic_forward.1} parent=0 // pred_fallthru
    _
  // Predicated region
  $region50: #{critic_forward.1} parent=0 // pred_check
    _
  $region51: #{critic_forward.1} parent=0 // pred_check_branch
    %45 = sbr.rel (0) target = $region53
  $region52: #{critic_forward.1} parent=0 // pred_region
    _
  $region53: #{critic_forward.1} parent=0 // pred_fallthru
    _
  %v47 = vld [vmem:[%s0] sm:$0xff]
  %v48 = vld [vmem:[%s1] sm:$0xff]
  %v49 = vpack.c.bf16 %v47, %v47
  %v50 = vld [vmem:[%s2] sm:$0xf]
  %v51 = vld [vmem:[%s2 + $0x4] sm:$0xf]
  %v52 = vld [vmem:[%s3] sm:$0x1]
  %v54 = vlaneseq
  %v55 = vshrl.u32 %v54, 7
  %v56 = vsub.s32 0, %v55
  %v57 = vrot.slane %v52, %v56
  %v61 = vunpack.c.l.b16 %v50
  %v62 = vunpack.c.l.b16 %v51
  %v63 = vpack.c.b16 %v62, %v61
  %vm65 = vcmask 130048
  %v67 = vsel %vm65, %v49, 0
  %69 = vmatprep.subr.bf16.mxu0 0
  %70 = vmatpush1.bf16.msra.mxu0 0
  %71 = vmatprep.subr.bf16.mxu0 0
  %72 = vmatpush1.bf16.msra.mxu0 0
  %73 = vmatprep.subr.bf16.mxu0 0
  %74 = vmatpush1.bf16.msra.mxu0 0
  %75 = vmatprep.subr.bf16.mxu0 0
  %76 = vmatpush1.bf16.msra.mxu0 0
  %77 = vmatprep.subr.bf16.mxu0 0
  %78 = vmatpush1.bf16.msra.mxu0 0
  %79 = vmatprep.subr.bf16.mxu0 0
  %80 = vmatpush1.bf16.msra.mxu0 0
  %81 = vmatprep.subr.bf16.mxu0 0
  %82 = vmatpush1.bf16.msra.mxu0 0
  %83 = vmatprep.subr.bf16.mxu0 0
  %84 = vmatpush1.bf16.msra.mxu0 %v63
  %85 = vmatprep.subr.bf16.mxu0 0
  %86 = vmatpush2.bf16.msra.mxu0 0
  %87 = vmatprep.subr.bf16.mxu0 0
  %88 = vmatpush2.bf16.msra.mxu0 0
  %89 = vmatprep.subr.bf16.mxu0 0
  %90 = vmatpush2.bf16.msra.mxu0 0
  %91 = vmatprep.subr.bf16.mxu0 0
  %92 = vmatpush2.bf16.msra.mxu0 0
  %93 = vmatprep.subr.bf16.mxu0 0
  %94 = vmatpush2.bf16.msra.mxu0 0
  %95 = vmatprep.subr.bf16.mxu0 0
  %96 = vmatpush2.bf16.msra.mxu0 0
  %97 = vmatprep.subr.bf16.mxu0 0
  %98 = vmatpush2.bf16.msra.mxu0 0
  %99 = vmatprep.subr.bf16.mxu0 0
  %100 = vmatpush2.bf16.msra.mxu0 0
  %101 = vmatprep.mubr.bf16.mxu0 0
  %102 = vmatmul.mubr.bf16.gmra.mxu0 %v67
  %v103 = vpop.f32.mrf.mxu0
  %v104 = vadd.f32 %v57, %v103
  %v105 = vpop.f32.mrf.mxu0
  %v106 = vpop.f32.mrf.mxu0
  %v107 = vpop.f32.mrf.mxu0
  %108 = vdwg.mxu0
  %v109 = vmax.f32 %v104, 0.0
  %v110 = vpack.c.bf16 %v109, %v109
  %v111 = vld [vmem:[%s4] sm:$0xf]
  %v112 = vld [vmem:[%s4 + $0x4] sm:$0xf]
  %v113 = vld [vmem:[%s4 + $0x8] sm:$0xf]
  %v114 = vld [vmem:[%s4 + $0xc] sm:$0xf]
  %v115 = vpack.c.bf16 %v48, %v48
  %v116 = vld [vmem:[%s5] sm:$0xf]
  %vm117 = vcmask 64512
  %v119 = vsel %vm117, %v115, 0
  %vm121 = vcmask 1043456
  %v123 = vsel %vm121, %v116, 0
  %125 = vmatprep.subr.bf16.mxu0 0
  %126 = vmatpush1.bf16.msra.mxu0 0
  %127 = vmatprep.subr.bf16.mxu0 0
  %128 = vmatpush1.bf16.msra.mxu0 0
  %129 = vmatprep.subr.bf16.mxu0 0
  %130 = vmatpush1.bf16.msra.mxu0 0
  %131 = vmatprep.subr.bf16.mxu0 0
  %132 = vmatpush1.bf16.msra.mxu0 0
  %133 = vmatprep.subr.bf16.mxu0 0
  %134 = vmatpush1.bf16.msra.mxu0 0
  %135 = vmatprep.subr.bf16.mxu0 0
  %136 = vmatpush1.bf16.msra.mxu0 0
  %137 = vmatprep.subr.bf16.mxu0 0
  %138 = vmatpush1.bf16.msra.mxu0 0
  %139 = vmatprep.subr.bf16.mxu0 0
  %140 = vmatpush1.bf16.msra.mxu0 %v123
  %141 = vmatprep.subr.bf16.mxu0 0
  %142 = vmatpush2.bf16.msra.mxu0 0
  %143 = vmatprep.subr.bf16.mxu0 0
  %144 = vmatpush2.bf16.msra.mxu0 0
  %145 = vmatprep.subr.bf16.mxu0 0
  %146 = vmatpush2.bf16.msra.mxu0 0
  %147 = vmatprep.subr.bf16.mxu0 0
  %148 = vmatpush2.bf16.msra.mxu0 0
  %149 = vmatprep.subr.bf16.mxu0 0
  %150 = vmatpush2.bf16.msra.mxu0 0
  %151 = vmatprep.subr.bf16.mxu0 0
  %152 = vmatpush2.bf16.msra.mxu0 0
  %153 = vmatprep.subr.bf16.mxu0 0
  %154 = vmatpush2.bf16.msra.mxu0 0
  %155 = vmatprep.subr.bf16.mxu0 0
  %156 = vmatpush2.bf16.msra.mxu0 0
  %157 = vmatprep.mubr.bf16.mxu0 0
  %158 = vmatmul.mubr.bf16.gmra.mxu0 %v119
  %v159 = vpop.f32.mrf.mxu0
  %v160 = vadd.f32 0.0, %v159
  %v161 = vpop.f32.mrf.mxu0
  %v162 = vpop.f32.mrf.mxu0
  %v163 = vpop.f32.mrf.mxu0
  %164 = vdwg.mxu0
  %v169 = vunpack.c.l.b16 %v111
  %v170 = vunpack.c.l.b16 %v112
  %v171 = vunpack.c.l.b16 %v113
  %v172 = vunpack.c.l.b16 %v114
  %v173 = vpack.c.b16 %v170, %v169
  %v174 = vpack.c.b16 %v172, %v171
  %vm177 = vcmask 261120
  %v179 = vsel %vm177, %v110, 0
  %181 = vmatprep.subr.bf16.mxu0 0
  %182 = vmatpush1.bf16.msra.mxu0 0
  %183 = vmatprep.subr.bf16.mxu0 0
  %184 = vmatpush1.bf16.msra.mxu0 0
  %185 = vmatprep.subr.bf16.mxu0 0
  %186 = vmatpush1.bf16.msra.mxu0 0
  %187 = vmatprep.subr.bf16.mxu0 0
  %188 = vmatpush1.bf16.msra.mxu0 0
  %189 = vmatprep.subr.bf16.mxu0 0
  %190 = vmatpush1.bf16.msra.mxu0 0
  %191 = vmatprep.subr.bf16.mxu0 0
  %192 = vmatpush1.bf16.msra.mxu0 0
  %193 = vmatprep.subr.bf16.mxu0 0
  %194 = vmatpush1.bf16.msra.mxu0 %v174
  %195 = vmatprep.subr.bf16.mxu0 0
  %196 = vmatpush1.bf16.msra.mxu0 %v173
  %197 = vmatprep.subr.bf16.mxu0 0
  %198 = vmatpush2.bf16.msra.mxu0 0
  %199 = vmatprep.subr.bf16.mxu0 0
  %200 = vmatpush2.bf16.msra.mxu0 0
  %201 = vmatprep.subr.bf16.mxu0 0
  %202 = vmatpush2.bf16.msra.mxu0 0
  %203 = vmatprep.subr.bf16.mxu0 0
  %204 = vmatpush2.bf16.msra.mxu0 0
  %205 = vmatprep.subr.bf16.mxu0 0
  %206 = vmatpush2.bf16.msra.mxu0 0
  %207 = vmatprep.subr.bf16.mxu0 0
  %208 = vmatpush2.bf16.msra.mxu0 0
  %209 = vmatprep.subr.bf16.mxu0 0
  %210 = vmatpush2.bf16.msra.mxu0 0
  %211 = vmatprep.subr.bf16.mxu0 0
  %212 = vmatpush2.bf16.msra.mxu0 0
  %213 = vmatprep.mubr.bf16.mxu0 0
  %214 = vmatmul.mubr.bf16.gmra.mxu0 %v179
  %v215 = vpop.f32.mrf.mxu0
  %v216 = vadd.f32 %v160, %v215
  %v217 = vpop.f32.mrf.mxu0
  %v218 = vpop.f32.mrf.mxu0
  %v219 = vpop.f32.mrf.mxu0
  %220 = vdwg.mxu0
  %v221 = vld [vmem:[%s6] sm:$0x1]
  %v223 = vlaneseq
  %v224 = vshrl.u32 %v223, 7
  %v225 = vsub.s32 0, %v224
  %v226 = vrot.slane %v221, %v225
  %v228 = vadd.f32 %v216, %v226
  %v229 = vmax.f32 %v228, 0.0
  %v230 = vpack.c.bf16 %v229, %v229
  %v231 = vld [vmem:[%s7] sm:$0xf]
  %v232 = vld [vmem:[%s7 + $0x4] sm:$0xf]
  %v233 = vld [vmem:[%s7 + $0x8] sm:$0xf]
  %v234 = vld [vmem:[%s7 + $0xc] sm:$0xf]
  %v235 = vld [vmem:[%s7 + $0x10] sm:$0xf]
  %v236 = vld [vmem:[%s7 + $0x14] sm:$0xf]
  %v237 = vld [vmem:[%s7 + $0x18] sm:$0xf]
  %v238 = vld [vmem:[%s7 + $0x1c] sm:$0xf]
  %v239 = vld [vmem:[%s8] sm:$0x1]
  %v241 = vlaneseq
  %v242 = vshrl.u32 %v241, 7
  %v243 = vsub.s32 0, %v242
  %v244 = vrot.slane %v239, %v243
  %v254 = vunpack.c.l.b16 %v231
  %v255 = vunpack.c.l.b16 %v232
  %v256 = vunpack.c.l.b16 %v233
  %v257 = vunpack.c.l.b16 %v234
  %v258 = vunpack.c.l.b16 %v235
  %v259 = vunpack.c.l.b16 %v236
  %v260 = vunpack.c.l.b16 %v237
  %v261 = vunpack.c.l.b16 %v238
  %v262 = vpack.c.b16 %v255, %v254
  %v263 = vpack.c.b16 %v257, %v256
  %v264 = vpack.c.b16 %v259, %v258
  %v265 = vpack.c.b16 %v261, %v260
  %vm270 = vcmask 523264
  %v272 = vsel %vm270, %v230, 0
  %274 = vmatprep.subr.bf16.mxu0 0
  %275 = vmatpush1.bf16.msra.mxu0 0
  %276 = vmatprep.subr.bf16.mxu0 0
  %277 = vmatpush1.bf16.msra.mxu0 0
  %278 = vmatprep.subr.bf16.mxu0 0
  %279 = vmatpush1.bf16.msra.mxu0 0
  %280 = vmatprep.subr.bf16.mxu0 0
  %281 = vmatpush1.bf16.msra.mxu0 0
  %282 = vmatprep.subr.bf16.mxu0 0
  %283 = vmatpush1.bf16.msra.mxu0 %v265
  %284 = vmatprep.subr.bf16.mxu0 0
  %285 = vmatpush1.bf16.msra.mxu0 %v264
  %286 = vmatprep.subr.bf16.mxu0 0
  %287 = vmatpush1.bf16.msra.mxu0 %v263
  %288 = vmatprep.subr.bf16.mxu0 0
  %289 = vmatpush1.bf16.msra.mxu0 %v262
  %290 = vmatprep.subr.bf16.mxu0 0
  %291 = vmatpush2.bf16.msra.mxu0 0
  %292 = vmatprep.subr.bf16.mxu0 0
  %293 = vmatpush2.bf16.msra.mxu0 0
  %294 = vmatprep.subr.bf16.mxu0 0
  %295 = vmatpush2.bf16.msra.mxu0 0
  %296 = vmatprep.subr.bf16.mxu0 0
  %297 = vmatpush2.bf16.msra.mxu0 0
  %298 = vmatprep.subr.bf16.mxu0 0
  %299 = vmatpush2.bf16.msra.mxu0 0
  %300 = vmatprep.subr.bf16.mxu0 0
  %301 = vmatpush2.bf16.msra.mxu0 0
  %302 = vmatprep.subr.bf16.mxu0 0
  %303 = vmatpush2.bf16.msra.mxu0 0
  %304 = vmatprep.subr.bf16.mxu0 0
  %305 = vmatpush2.bf16.msra.mxu0 0
  %306 = vmatprep.mubr.bf16.mxu0 0
  %307 = vmatmul.mubr.bf16.gmra.mxu0 %v272
  %v308 = vpop.f32.mrf.mxu0
  %v309 = vadd.f32 %v244, %v308
  %v310 = vpop.f32.mrf.mxu0
  %v311 = vpop.f32.mrf.mxu0
  %v312 = vpop.f32.mrf.mxu0
  %313 = vdwg.mxu0
  %v314 = vmax.f32 %v309, 0.0
  %v315 = vpack.c.bf16 %v314, %v314
  %v316 = vld [vmem:[%s9] sm:$0xf]
  %v317 = vld [vmem:[%s9 + $0x4] sm:$0xf]
  %v318 = vld [vmem:[%s9 + $0x8] sm:$0xf]
  %v319 = vld [vmem:[%s9 + $0xc] sm:$0xf]
  %v320 = vld [vmem:[%s10] sm:$0x1]
  %v322 = vlaneseq
  %v323 = vshrl.u32 %v322, 7
  %v324 = vsub.s32 0, %v323
  %v325 = vrot.slane %v320, %v324
  %v331 = vunpack.c.l.b16 %v316
  %v332 = vunpack.c.l.b16 %v317
  %v333 = vunpack.c.l.b16 %v318
  %v334 = vunpack.c.l.b16 %v319
  %v335 = vpack.c.b16 %v332, %v331
  %v336 = vpack.c.b16 %v334, %v333
  %v340 = vsel %vm177, %v315, 0
  %342 = vmatprep.subr.bf16.mxu0 0
  %343 = vmatpush1.bf16.msra.mxu0 0
  %344 = vmatprep.subr.bf16.mxu0 0
  %345 = vmatpush1.bf16.msra.mxu0 0
  %346 = vmatprep.subr.bf16.mxu0 0
  %347 = vmatpush1.bf16.msra.mxu0 0
  %348 = vmatprep.subr.bf16.mxu0 0
  %349 = vmatpush1.bf16.msra.mxu0 0
  %350 = vmatprep.subr.bf16.mxu0 0
  %351 = vmatpush1.bf16.msra.mxu0 0
  %352 = vmatprep.subr.bf16.mxu0 0
  %353 = vmatpush1.bf16.msra.mxu0 0
  %354 = vmatprep.subr.bf16.mxu0 0
  %355 = vmatpush1.bf16.msra.mxu0 %v336
  %356 = vmatprep.subr.bf16.mxu0 0
  %357 = vmatpush1.bf16.msra.mxu0 %v335
  %358 = vmatprep.subr.bf16.mxu0 0
  %359 = vmatpush2.bf16.msra.mxu0 0
  %360 = vmatprep.subr.bf16.mxu0 0
  %361 = vmatpush2.bf16.msra.mxu0 0
  %362 = vmatprep.subr.bf16.mxu0 0
  %363 = vmatpush2.bf16.msra.mxu0 0
  %364 = vmatprep.subr.bf16.mxu0 0
  %365 = vmatpush2.bf16.msra.mxu0 0
  %366 = vmatprep.subr.bf16.mxu0 0
  %367 = vmatpush2.bf16.msra.mxu0 0
  %368 = vmatprep.subr.bf16.mxu0 0
  %369 = vmatpush2.bf16.msra.mxu0 0
  %370 = vmatprep.subr.bf16.mxu0 0
  %371 = vmatpush2.bf16.msra.mxu0 0
  %372 = vmatprep.subr.bf16.mxu0 0
  %373 = vmatpush2.bf16.msra.mxu0 0
  %374 = vmatprep.mubr.bf16.mxu0 0
  %375 = vmatmul.mubr.bf16.gmra.mxu0 %v340
  %v376 = vpop.f32.mrf.mxu0
  %v377 = vadd.f32 %v325, %v376
  %v378 = vpop.f32.mrf.mxu0
  %v379 = vpop.f32.mrf.mxu0
  %v380 = vpop.f32.mrf.mxu0
  %381 = vdwg.mxu0
  %v382 = vmax.f32 %v377, 0.0
  %v383 = vld [vmem:[%s11] sm:$0x1]
  %v385 = vlaneseq
  %v386 = vshrl.u32 %v385, 7
  %v387 = vsub.s32 0, %v386
  %v388 = vrot.slane %v383, %v387
  %v390 = vmul.f32 %v382, %v388
  %v391 = vsel %vm177, %v390, 0.0
  %392 = vadd.xlane.f32.xlu0 %v391
  %v393 = vpop.xlane.xlu0 %392
  %v394 = vld [vmem:[#allocation2] sm:$0x1]
  %v396 = vlaneseq
  %v397 = vshrl.u32 %v396, 7
  %v398 = vsub.s32 0, %v397
  %v399 = vrot.slane %v394, %v398
  %v401 = vadd.f32 %v393, %v399
  %vm402 = vcmask 7168
  %403 = vst.msk [vmem:[%s13] sm:$0xff] %vm402, %v401
  // Predicated region
  $region54: #{critic_forward.1} parent=0 // pred_check
    _
  $region55: #{critic_forward.1} parent=0 // pred_check_branch
    %405 = sbr.rel (0) target = $region57
  $region56: #{critic_forward.1} parent=0 // pred_region
    _
  $region57: #{critic_forward.1} parent=0 // pred_fallthru
    _
  // Predicated region
  $region58: #{critic_forward.1} parent=0 // pred_check
    _
  $region59: #{critic_forward.1} parent=0 // pred_check_branch
    %407 = sbr.rel (0) target = $region61
  $region60: #{critic_forward.1} parent=0 // pred_region
    _
  $region61: #{critic_forward.1} parent=0 // pred_fallthru
    _

</llo_original>
